<compile_context>
chip_gen: v5e
topology: v5e:2x2
jax: 0.10.0
libtpu: 0.0.40
codegen_flags: <defaults>
</compile_context>

<pallas_src>
import functools

import jax
import jax.numpy as jnp
from jax.experimental import pallas as pl
from jax.experimental.pallas import tpu as pltpu

_MIB = 1024 * 1024


def _conv_stats_kernel(p_ref, w_ref, y_ref, s1_ref, s2_ref, *, halo):
    """Conv for one (batch-block, row-chunk): 2 tap-folded MXU matmuls + BN partial stats.

    p_ref : (bn, 1, (R+1)*Wo, 8*Cin)  tap-folded planes (contraction axis K = 8*Cin)
    w_ref : (2, Cout, 8*Cin)          per-dh weights (VMEM resident)
    y_ref : (bn, Cout, R*Wo)          conv output (channels-in-sublanes, lane-dense pixels)
    s1/s2 : (1, 1, Cout, 1)           per-block partial sum / sum of squares
    halo  : Wo -- row offset of the dh=1 window inside the plane chunk
    """
    bn, cout, m = y_ref.shape
    w0 = w_ref[0]
    w1 = w_ref[1]
    dn = (((1,), (1,)), ((), ()))
    s1 = jnp.zeros((cout, 1), jnp.float32)
    s2 = jnp.zeros((cout, 1), jnp.float32)
    for b in range(bn):                       # bn <= 8; body is just two dots -> cheap unroll
        xs0 = p_ref[b, 0, 0:m, :]             # output rows r       (kh = ph)
        xs1 = p_ref[b, 0, halo:halo + m, :]   # output rows r, dh=1 (kh = 2 + ph)
        acc = jax.lax.dot_general(w0, xs0, dn, preferred_element_type=jnp.float32)
        acc = acc + jax.lax.dot_general(w1, xs1, dn, preferred_element_type=jnp.float32)
        y_ref[b] = acc                        # single store, no VMEM read-modify-write
        s1 = s1 + jnp.sum(acc, axis=1, keepdims=True)
        s2 = s2 + jnp.sum(acc * acc, axis=1, keepdims=True)
    s1_ref[0, 0] = s1
    s2_ref[0, 0] = s2


def _bn_act_kernel(y_ref, scale_ref, shift_ref, o_ref, *, act):
    """Fused BatchNorm affine (scale/shift precomputed from batch stats) + activation."""
    z = y_ref[...] * scale_ref[...] + shift_ref[...]
    if act == "relu":
        o_ref[...] = jnp.maximum(z, 0.0)
    else:  # LeakyReLU(0.2)
        o_ref[...] = jnp.where(z > 0.0, z, 0.2 * z)


def _vmem_capacity_bytes():
    try:
        info = pltpu.get_tpu_info()
        cap = getattr(info, "vmem_capacity_bytes", None)
        if cap:
            return int(cap)
    except Exception:
        pass
    return 64 * _MIB  # conservative (v7x-sized) fallback


def _choose_tiling(N, Ho, Wo, Cin, Cout, in_itemsize, budget, max_rows=None):
    """Pick (images-per-block bn, output-rows-per-chunk R) so double-buffered blocks fit."""
    K = 8 * Cin

    def step_bytes(bn_, r_):
        pb = bn_ * (r_ + 1) * Wo * K * in_itemsize   # planes block (with halo row)
        yb = bn_ * Cout * r_ * Wo * 4                # y block (f32)
        wb = 2 * Cout * K * in_itemsize              # resident tap weights
        return 2 * (pb + yb + wb)                    # x2 for double buffering

    row_cap = Ho if max_rows is None else max(1, min(max_rows, Ho))

    def rows_ok(r_):
        # y/out block lane dim must be a multiple of 128 unless it spans the full image.
        return r_ == Ho or (r_ * Wo) % 128 == 0

    R = None
    if row_cap == Ho and step_bytes(1, Ho) <= budget:
        R = Ho
    if R is None:
        for cand in range(1, row_cap + 1):
            if Ho % cand == 0 and rows_ok(cand) and step_bytes(1, cand) <= budget:
                R = cand
        if R is None:
            R = row_cap if (Ho % row_cap == 0 and rows_ok(row_cap)) else Ho

    bn = 1
    if R == Ho:  # batch-block only when a whole image is a single chunk
        for cand in range(2, min(N, 8) + 1):
            if N % cand == 0 and step_bytes(cand, R) <= budget:
                bn = cand
    return bn, R


@functools.partial(jax.jit,
                   static_argnames=("act", "eps", "matmul_dtype", "max_rows_per_chunk"))
def block_forward(x, weight, gamma, beta, *, act="relu", eps=1e-5,
                  matmul_dtype="float32", max_rows_per_chunk=None):
    """Forward of Block(down=True, use_dropout=False).

    x      : (N, Cin, H, W) float32 NCHW (H, W even)
    weight : (Cout, Cin, 4, 4) float32  (Conv2d stride 2, reflect pad 1, no bias)
    gamma  : (Cout,) BatchNorm weight
    beta   : (Cout,) BatchNorm bias
    returns: (N, Cout, H//2, W//2) float32
    """
    N, Cin, H, W = x.shape
    Cout = weight.shape[0]
    assert H % 2 == 0 and W % 2 == 0, "even spatial dims expected"
    assert act in ("relu", "leaky")
    Ho, Wo = H // 2, W // 2
    m_img = Ho * Wo
    K = 8 * Cin
    mm_dtype = jnp.dtype(matmul_dtype)

    # ---- XLA glue (fused): NHWC + reflect pad + tap-folded planes (K = 8*Cin) ----
    xh = jnp.transpose(x, (0, 2, 3, 1)).astype(jnp.float32)          # (N, H, W, Cin)
    xp = jnp.pad(xh, ((0, 0), (1, 1), (1, 1), (0, 0)), mode="reflect")
    tap_x, tap_w0, tap_w1 = [], [], []
    for ph in range(2):
        for kw in range(4):
            # plane[(ph,kw)][n, r, c, :] == xp[n, 2*r + ph, 2*c + kw, :]
            tap_x.append(xp[:, ph:ph + 2 * (Ho + 1):2, kw:kw + 2 * Wo:2, :])
            tap_w0.append(weight[:, :, ph, kw])        # kh = ph      (dh = 0)
            tap_w1.append(weight[:, :, 2 + ph, kw])    # kh = 2 + ph  (dh = 1)
    planes = jnp.concatenate(tap_x, axis=-1)                         # (N, Ho+1, Wo, K)
    wt = jnp.stack([jnp.concatenate(tap_w0, axis=-1),
                    jnp.concatenate(tap_w1, axis=-1)], axis=0).astype(mm_dtype)  # (2,Cout,K)

    # ---- generation-aware VMEM limit + tiling ----
    vmem_cap = _vmem_capacity_bytes()
    vmem_limit = int(min(vmem_cap - 8 * _MIB, 100 * _MIB))  # ~100 MiB v5e/v6e, ~56 MiB v7x
    budget = max(int(vmem_limit * 0.85), 8 * _MIB)
    bn, R = _choose_tiling(N, Ho, Wo, Cin, Cout, mm_dtype.itemsize, budget,
                           max_rows=max_rows_per_chunk)
    grid_n = N // bn
    n_chunks = Ho // R
    m_chunk = R * Wo
    rows_chunk = (R + 1) * Wo

    # Planes per row-chunk with a one-row halo (zero duplication when n_chunks == 1).
    # NOTE: the dh=1 window start is Wo; when Wo % 8 != 0 (deepest tiny layers) Mosaic may
    # relayout that small window -- negligible at those sizes.
    if n_chunks == 1:
        planes_c = planes.reshape(N, 1, rows_chunk, K)
    else:
        planes_c = jnp.stack(
            [planes[:, j * R: j * R + R + 1] for j in range(n_chunks)], axis=1
        ).reshape(N, n_chunks, rows_chunk, K)
    planes_c = planes_c.astype(mm_dtype)

    cparams = pltpu.CompilerParams(
        dimension_semantics=("parallel", "parallel"),
        vmem_limit_bytes=vmem_limit,
    )

    # ---- Kernel 1: conv (2 tap-folded matmuls per image/chunk) + BN partial stats ----
    y, s1, s2 = pl.pallas_call(
        functools.partial(_conv_stats_kernel, halo=Wo),
        out_shape=(
            jax.ShapeDtypeStruct((N, Cout, m_img), jnp.float32),
            jax.ShapeDtypeStruct((grid_n, n_chunks, Cout, 1), jnp.float32),
            jax.ShapeDtypeStruct((grid_n, n_chunks, Cout, 1), jnp.float32),
        ),
        grid=(grid_n, n_chunks),
        in_specs=[
            pl.BlockSpec((bn, 1, rows_chunk, K), lambda nb, mb: (nb, mb, 0, 0)),
            pl.BlockSpec((2, Cout, K), lambda nb, mb: (0, 0, 0)),
        ],
        out_specs=(
            pl.BlockSpec((bn, Cout, m_chunk), lambda nb, mb: (nb, 0, mb)),
            pl.BlockSpec((1, 1, Cout, 1), lambda nb, mb: (nb, mb, 0, 0)),
            pl.BlockSpec((1, 1, Cout, 1), lambda nb, mb: (nb, mb, 0, 0)),
        ),
        compiler_params=cparams,
    )(planes_c, wt)

    # ---- tiny glue: fold batch stats + gamma/beta into per-channel scale/shift ----
    cnt = jnp.float32(N * m_img)
    mean = jnp.sum(s1, axis=(0, 1)) / cnt                             # (Cout, 1)
    var = jnp.maximum(jnp.sum(s2, axis=(0, 1)) / cnt - mean * mean, 0.0)
    inv = jax.lax.rsqrt(var + eps)
    g = gamma.reshape(Cout, 1).astype(jnp.float32)
    b_ = beta.reshape(Cout, 1).astype(jnp.float32)
    scale = (g * inv)[None]                                           # (1, Cout, 1)
    shift = (b_ - mean * g * inv)[None]

    # ---- Kernel 2: fused BN affine + activation, written in place over y ----
    out_flat = pl.pallas_call(
        functools.partial(_bn_act_kernel, act=act),
        out_shape=jax.ShapeDtypeStruct((N, Cout, m_img), jnp.float32),
        grid=(grid_n, n_chunks),
        in_specs=[
            pl.BlockSpec((bn, Cout, m_chunk), lambda nb, mb: (nb, 0, mb)),
            pl.BlockSpec((1, Cout, 1), lambda nb, mb: (0, 0, 0)),
            pl.BlockSpec((1, Cout, 1), lambda nb, mb: (0, 0, 0)),
        ],
        out_specs=pl.BlockSpec((bn, Cout, m_chunk), lambda nb, mb: (nb, 0, mb)),
        input_output_aliases={0: 0},
        compiler_params=cparams,
    )(y, scale, shift)

    # TODO(synk): down=False (ConvTranspose2d) and use_dropout=True (Dropout(0.5)) branches
    # of Block are not implemented; this covers the default down / no-dropout path.
    return out_flat.reshape(N, Cout, Ho, Wo)       # free row-major reshape -> NCHW


def _reference(x, weight, gamma, beta, *, act="relu", eps=1e-5):
    """Pure-JAX reference (reflect-pad conv + training-mode BN + activation)."""
    xp = jnp.pad(x, ((0, 0), (0, 0), (1, 1), (1, 1)), mode="reflect")
    y = jax.lax.conv_general_dilated(
        xp, weight, window_strides=(2, 2), padding="VALID",
        dimension_numbers=("NCHW", "OIHW", "NCHW"),
        precision=jax.lax.Precision.HIGHEST)
    mean = y.mean(axis=(0, 2, 3), keepdims=True)
    var = y.var(axis=(0, 2, 3), keepdims=True)
    z = (gamma.reshape(1, -1, 1, 1) * (y - mean) / jnp.sqrt(var + eps)
         + beta.reshape(1, -1, 1, 1))
    return jnp.maximum(z, 0.0) if act == "relu" else jnp.where(z > 0.0, z, 0.2 * z)


if __name__ == "__main__":
    key = jax.random.PRNGKey(0)
    k_x, k_w, k_g, k_b, k_x2 = jax.random.split(key, 5)

    N, Cin, H, W = 2, 4, 16, 16
    Cout = 8
    x = jax.random.normal(k_x, (N, Cin, H, W), dtype=jnp.float32)
    weight = 0.1 * jax.random.normal(k_w, (Cout, Cin, 4, 4), dtype=jnp.float32)
    gamma = 1.0 + 0.1 * jax.random.normal(k_g, (Cout,), dtype=jnp.float32)
    beta = 0.1 * jax.random.normal(k_b, (Cout,), dtype=jnp.float32)

    # f32 path: relu + leaky.
    out = jax.block_until_ready(block_forward(x, weight, gamma, beta, act="relu"))
    ref = _reference(x, weight, gamma, beta, act="relu")
    assert out.shape == (N, Cout, H // 2, W // 2)
    assert jnp.allclose(out, ref, atol=2e-4, rtol=2e-4), "relu path mismatch vs reference"

    out_l = jax.block_until_ready(block_forward(x, weight, gamma, beta, act="leaky"))
    ref_l = _reference(x, weight, gamma, beta, act="leaky")
    assert jnp.allclose(out_l, ref_l, atol=2e-4, rtol=2e-4), "leaky path mismatch vs reference"

    # Spatially-chunked path (the multi-chunk grid used for large images / v7x VMEM limits).
    x2 = jax.random.normal(k_x2, (N, Cin, 32, 32), dtype=jnp.float32)
    out_c = jax.block_until_ready(
        block_forward(x2, weight, gamma, beta, act="relu", max_rows_per_chunk=8))
    ref_c = _reference(x2, weight, gamma, beta, act="relu")
    assert jnp.allclose(out_c, ref_c, atol=2e-4, rtol=2e-4), "chunked path mismatch vs reference"

    # bf16 matmul operands with f32 accumulation (opt-in fast path, looser tolerance).
    out_bf = jax.block_until_ready(
        block_forward(x, weight, gamma, beta, act="relu", matmul_dtype="bfloat16"))
    assert jnp.allclose(out_bf, ref, atol=2e-2, rtol=2e-2), "bf16 path mismatch vs reference"

    print("KERNEL_OK")
</pallas_src>

<mosaic_0001>
module attributes {stable_mosaic.version = 11 : i64} {
  func.func @_bn_act_kernel(%arg0: i32, %arg1: i32, %arg2: memref<2x8x64xf32, #tpu.memory_space<vmem>>, %arg3: memref<1x8x1xf32, #tpu.memory_space<vmem>>, %arg4: memref<1x8x1xf32, #tpu.memory_space<vmem>>, %arg5: memref<2x8x64xf32, #tpu.memory_space<vmem>>) attributes {dimension_semantics = [#tpu.dimension_semantics<parallel>, #tpu.dimension_semantics<parallel>], iteration_bounds = array<i64: 1, 1>, scalar_prefetch = 0 : i64, scratch_operands = 0 : i64, tpu.core_type = #tpu.core_type<tc>, window_params = [{transform_indices = @transform_0, window_bounds = array<i64: 2, 8, 64>}, {pipeline_mode = #tpu.pipeline_mode<synchronous>, transform_indices = @transform_1, window_bounds = array<i64: 1, 8, 1>}, {pipeline_mode = #tpu.pipeline_mode<synchronous>, transform_indices = @transform_2, window_bounds = array<i64: 1, 8, 1>}, {transform_indices = @transform_3, window_bounds = array<i64: 2, 8, 64>}]} {
    %c0 = arith.constant 0 : index
    %c0_0 = arith.constant 0 : index
    %c0_1 = arith.constant 0 : index
    %0 = vector.load %arg2[%c0, %c0_0, %c0_1] : memref<2x8x64xf32, #tpu.memory_space<vmem>>, vector<2x8x64xf32>
    %c0_2 = arith.constant 0 : index
    %c0_3 = arith.constant 0 : index
    %c0_4 = arith.constant 0 : index
    %1 = vector.load %arg3[%c0_2, %c0_3, %c0_4] : memref<1x8x1xf32, #tpu.memory_space<vmem>>, vector<1x8x1xf32>
    %2 = vector.broadcast %1 : vector<1x8x1xf32> to vector<2x8x64xf32>
    %3 = arith.mulf %0, %2 : vector<2x8x64xf32>
    %c0_5 = arith.constant 0 : index
    %c0_6 = arith.constant 0 : index
    %c0_7 = arith.constant 0 : index
    %4 = vector.load %arg4[%c0_5, %c0_6, %c0_7] : memref<1x8x1xf32, #tpu.memory_space<vmem>>, vector<1x8x1xf32>
    %5 = vector.broadcast %4 : vector<1x8x1xf32> to vector<2x8x64xf32>
    %6 = arith.addf %3, %5 : vector<2x8x64xf32>
    %cst = arith.constant 0.000000e+00 : f32
    %7 = vector.broadcast %cst : f32 to vector<2x8x64xf32>
    %8 = arith.maximumf %6, %7 : vector<2x8x64xf32>
    %c0_8 = arith.constant 0 : index
    %c0_9 = arith.constant 0 : index
    %c0_10 = arith.constant 0 : index
    %9 = vector.load %arg5[%c0_8, %c0_9, %c0_10] : memref<2x8x64xf32, #tpu.memory_space<vmem>>, vector<2x8x64xf32>
    tpu.vector_store %arg5[%c0_8, %c0_9, %c0_10], %8 {strides = array<i32>} : memref<2x8x64xf32, #tpu.memory_space<vmem>>, vector<2x8x64xf32>,
    return
  }
  func.func @transform_0(%arg0: i32, %arg1: i32) -> (i32, i32, i32) {
    %c0_i32 = arith.constant 0 : i32
    %c0_i32_0 = arith.constant 0 : i32
    return %arg0, %c0_i32, %arg1 : i32, i32, i32
  }
  func.func @transform_1(%arg0: i32, %arg1: i32) -> (i32, i32, i32) {
    %c0_i32 = arith.constant 0 : i32
    %c0_i32_0 = arith.constant 0 : i32
    %c0_i32_1 = arith.constant 0 : i32
    %c0_i32_2 = arith.constant 0 : i32
    return %c0_i32, %c0_i32_0, %c0_i32_1 : i32, i32, i32
  }
  func.func @transform_2(%arg0: i32, %arg1: i32) -> (i32, i32, i32) {
    %c0_i32 = arith.constant 0 : i32
    %c0_i32_0 = arith.constant 0 : i32
    %c0_i32_1 = arith.constant 0 : i32
    %c0_i32_2 = arith.constant 0 : i32
    return %c0_i32, %c0_i32_0, %c0_i32_1 : i32, i32, i32
  }
  func.func @transform_3(%arg0: i32, %arg1: i32) -> (i32, i32, i32) {
    %c0_i32 = arith.constant 0 : i32
    %c0_i32_0 = arith.constant 0 : i32
    return %arg0, %c0_i32, %arg1 : i32, i32, i32
  }
}

module attributes {stable_mosaic.version = 11 : i64} {
  func.func @_conv_stats_kernel(%arg0: i32, %arg1: i32, %arg2: memref<2x1x72x32xf32, #tpu.memory_space<vmem>>, %arg3: memref<2x8x32xf32, #tpu.memory_space<vmem>>, %arg4: memref<2x8x64xf32, #tpu.memory_space<vmem>>, %arg5: memref<1x1x8x1xf32, #tpu.memory_space<vmem>>, %arg6: memref<1x1x8x1xf32, #tpu.memory_space<vmem>>) attributes {dimension_semantics = [#tpu.dimension_semantics<parallel>, #tpu.dimension_semantics<parallel>], iteration_bounds = array<i64: 1, 1>, scalar_prefetch = 0 : i64, scratch_operands = 0 : i64, tpu.core_type = #tpu.core_type<tc>, window_params = [{transform_indices = @transform_0, window_bounds = array<i64: 2, 1, 72, 32>}, {pipeline_mode = #tpu.pipeline_mode<synchronous>, transform_indices = @transform_1, window_bounds = array<i64: 2, 8, 32>}, {transform_indices = @transform_2, window_bounds = array<i64: 2, 8, 64>}, {transform_indices = @transform_3, window_bounds = array<i64: 1, 1, 8, 1>}, {transform_indices = @transform_4, window_bounds = array<i64: 1, 1, 8, 1>}]} {
    %c0 = arith.constant 0 : index
    %c0_0 = arith.constant 0 : index
    %c0_1 = arith.constant 0 : index
    %0 = vector.load %arg3[%c0, %c0_0, %c0_1] : memref<2x8x32xf32, #tpu.memory_space<vmem>>, vector<1x8x32xf32>
    %1 = vector.shape_cast %0 : vector<1x8x32xf32> to vector<8x32xf32>
    %c1 = arith.constant 1 : index
    %c0_2 = arith.constant 0 : index
    %c0_3 = arith.constant 0 : index
    %2 = vector.load %arg3[%c1, %c0_2, %c0_3] : memref<2x8x32xf32, #tpu.memory_space<vmem>>, vector<1x8x32xf32>
    %3 = vector.shape_cast %2 : vector<1x8x32xf32> to vector<8x32xf32>
    %cst = arith.constant 0.000000e+00 : f32
    %4 = vector.broadcast %cst : f32 to vector<8x1xf32>
    %cst_4 = arith.constant 0.000000e+00 : f32
    %5 = vector.broadcast %cst_4 : f32 to vector<8x1xf32>
    %c0_5 = arith.constant 0 : index
    %c0_6 = arith.constant 0 : index
    %c0_7 = arith.constant 0 : index
    %c0_8 = arith.constant 0 : index
    %6 = vector.load %arg2[%c0_5, %c0_6, %c0_7, %c0_8] : memref<2x1x72x32xf32, #tpu.memory_space<vmem>>, vector<1x1x64x32xf32>
    %7 = vector.shape_cast %6 : vector<1x1x64x32xf32> to vector<64x32xf32>
    %c0_9 = arith.constant 0 : index
    %c0_10 = arith.constant 0 : index
    %c8 = arith.constant 8 : index
    %c0_11 = arith.constant 0 : index
    %8 = vector.load %arg2[%c0_9, %c0_10, %c8, %c0_11] : memref<2x1x72x32xf32, #tpu.memory_space<vmem>>, vector<1x1x64x32xf32>
    %9 = vector.shape_cast %8 : vector<1x1x64x32xf32> to vector<64x32xf32>
    %cst_12 = arith.constant dense<0.000000e+00> : vector<8x64xf32>
    %10 = tpu.matmul %1, %7, %cst_12 {dimension_numbers = #tpu.dot_dimension_numbers<[1], [1], [0], [0], [0, 0, 1, 0], [], []>} : vector<8x32xf32>, vector<64x32xf32>, vector<8x64xf32> -> vector<8x64xf32>
    %cst_13 = arith.constant dense<0.000000e+00> : vector<8x64xf32>
    %11 = tpu.matmul %3, %9, %cst_13 {dimension_numbers = #tpu.dot_dimension_numbers<[1], [1], [0], [0], [0, 0, 1, 0], [], []>} : vector<8x32xf32>, vector<64x32xf32>, vector<8x64xf32> -> vector<8x64xf32>
    %12 = arith.addf %10, %11 : vector<8x64xf32>
    %c0_14 = arith.constant 0 : index
    %c0_15 = arith.constant 0 : index
    %c0_16 = arith.constant 0 : index
    %13 = vector.load %arg4[%c0_14, %c0_15, %c0_16] : memref<2x8x64xf32, #tpu.memory_space<vmem>>, vector<1x8x64xf32>
    %14 = vector.shape_cast %13 : vector<1x8x64xf32> to vector<8x64xf32>
    %15 = vector.shape_cast %12 : vector<8x64xf32> to vector<1x8x64xf32>
    tpu.vector_store %arg4[%c0_14, %c0_15, %c0_16], %15 {strides = array<i32>} : memref<2x8x64xf32, #tpu.memory_space<vmem>>, vector<1x8x64xf32>,
    %cst_17 = arith.constant dense<0.000000e+00> : vector<8xf32>
    %16 = vector.multi_reduction <add>, %12, %cst_17 [1] : vector<8x64xf32> to vector<8xf32>
    %17 = vector.shape_cast %16 : vector<8xf32> to vector<8x1xf32>
    %18 = arith.addf %4, %17 : vector<8x1xf32>
    %19 = arith.mulf %12, %12 : vector<8x64xf32>
    %cst_18 = arith.constant dense<0.000000e+00> : vector<8xf32>
    %20 = vector.multi_reduction <add>, %19, %cst_18 [1] : vector<8x64xf32> to vector<8xf32>
    %21 = vector.shape_cast %20 : vector<8xf32> to vector<8x1xf32>
    %22 = arith.addf %5, %21 : vector<8x1xf32>
    %c1_19 = arith.constant 1 : index
    %c0_20 = arith.constant 0 : index
    %c0_21 = arith.constant 0 : index
    %c0_22 = arith.constant 0 : index
    %23 = vector.load %arg2[%c1_19, %c0_20, %c0_21, %c0_22] : memref<2x1x72x32xf32, #tpu.memory_space<vmem>>, vector<1x1x64x32xf32>
    %24 = vector.shape_cast %23 : vector<1x1x64x32xf32> to vector<64x32xf32>
    %c1_23 = arith.constant 1 : index
    %c0_24 = arith.constant 0 : index
    %c8_25 = arith.constant 8 : index
    %c0_26 = arith.constant 0 : index
    %25 = vector.load %arg2[%c1_23, %c0_24, %c8_25, %c0_26] : memref<2x1x72x32xf32, #tpu.memory_space<vmem>>, vector<1x1x64x32xf32>
    %26 = vector.shape_cast %25 : vector<1x1x64x32xf32> to vector<64x32xf32>
    %cst_27 = arith.constant dense<0.000000e+00> : vector<8x64xf32>
    %27 = tpu.matmul %1, %24, %cst_27 {dimension_numbers = #tpu.dot_dimension_numbers<[1], [1], [0], [0], [0, 0, 1, 0], [], []>} : vector<8x32xf32>, vector<64x32xf32>, vector<8x64xf32> -> vector<8x64xf32>
    %cst_28 = arith.constant dense<0.000000e+00> : vector<8x64xf32>
    %28 = tpu.matmul %3, %26, %cst_28 {dimension_numbers = #tpu.dot_dimension_numbers<[1], [1], [0], [0], [0, 0, 1, 0], [], []>} : vector<8x32xf32>, vector<64x32xf32>, vector<8x64xf32> -> vector<8x64xf32>
    %29 = arith.addf %27, %28 : vector<8x64xf32>
    %c1_29 = arith.constant 1 : index
    %c0_30 = arith.constant 0 : index
    %c0_31 = arith.constant 0 : index
    %30 = vector.load %arg4[%c1_29, %c0_30, %c0_31] : memref<2x8x64xf32, #tpu.memory_space<vmem>>, vector<1x8x64xf32>
    %31 = vector.shape_cast %30 : vector<1x8x64xf32> to vector<8x64xf32>
    %32 = vector.shape_cast %29 : vector<8x64xf32> to vector<1x8x64xf32>
    tpu.vector_store %arg4[%c1_29, %c0_30, %c0_31], %32 {strides = array<i32>} : memref<2x8x64xf32, #tpu.memory_space<vmem>>, vector<1x8x64xf32>,
    %cst_32 = arith.constant dense<0.000000e+00> : vector<8xf32>
    %33 = vector.multi_reduction <add>, %29, %cst_32 [1] : vector<8x64xf32> to vector<8xf32>
    %34 = vector.shape_cast %33 : vector<8xf32> to vector<8x1xf32>
    %35 = arith.addf %18, %34 : vector<8x1xf32>
    %36 = arith.mulf %29, %29 : vector<8x64xf32>
    %cst_33 = arith.constant dense<0.000000e+00> : vector<8xf32>
    %37 = vector.multi_reduction <add>, %36, %cst_33 [1] : vector<8x64xf32> to vector<8xf32>
    %38 = vector.shape_cast %37 : vector<8xf32> to vector<8x1xf32>
    %39 = arith.addf %22, %38 : vector<8x1xf32>
    %c0_34 = arith.constant 0 : index
    %c0_35 = arith.constant 0 : index
    %c0_36 = arith.constant 0 : index
    %c0_37 = arith.constant 0 : index
    %40 = vector.load %arg5[%c0_34, %c0_35, %c0_36, %c0_37] : memref<1x1x8x1xf32, #tpu.memory_space<vmem>>, vector<1x1x8x1xf32>
    %41 = vector.shape_cast %40 : vector<1x1x8x1xf32> to vector<8x1xf32>
    %42 = vector.shape_cast %35 : vector<8x1xf32> to vector<1x1x8x1xf32>
    tpu.vector_store %arg5[%c0_34, %c0_35, %c0_36, %c0_37], %42 {strides = array<i32>} : memref<1x1x8x1xf32, #tpu.memory_space<vmem>>, vector<1x1x8x1xf32>,
    %c0_38 = arith.constant 0 : index
    %c0_39 = arith.constant 0 : index
    %c0_40 = arith.constant 0 : index
    %c0_41 = arith.constant 0 : index
    %43 = vector.load %arg6[%c0_38, %c0_39, %c0_40, %c0_41] : memref<1x1x8x1xf32, #tpu.memory_space<vmem>>, vector<1x1x8x1xf32>
    %44 = vector.shape_cast %43 : vector<1x1x8x1xf32> to vector<8x1xf32>
    %45 = vector.shape_cast %39 : vector<8x1xf32> to vector<1x1x8x1xf32>
    tpu.vector_store %arg6[%c0_38, %c0_39, %c0_40, %c0_41], %45 {strides = array<i32>} : memref<1x1x8x1xf32, #tpu.memory_space<vmem>>, vector<1x1x8x1xf32>,
    return
  }
  func.func @transform_0(%arg0: i32, %arg1: i32) -> (i32, i32, i32, i32) {
    %c0_i32 = arith.constant 0 : i32
    %c0_i32_0 = arith.constant 0 : i32
    %c0_i32_1 = arith.constant 0 : i32
    return %arg0, %arg1, %c0_i32, %c0_i32_0 : i32, i32, i32, i32
  }
  func.func @transform_1(%arg0: i32, %arg1: i32) -> (i32, i32, i32) {
    %c0_i32 = arith.constant 0 : i32
    %c0_i32_0 = arith.constant 0 : i32
    %c0_i32_1 = arith.constant 0 : i32
    %c0_i32_2 = arith.constant 0 : i32
    return %c0_i32, %c0_i32_0, %c0_i32_1 : i32, i32, i32
  }
  func.func @transform_2(%arg0: i32, %arg1: i32) -> (i32, i32, i32) {
    %c0_i32 = arith.constant 0 : i32
    %c0_i32_0 = arith.constant 0 : i32
    return %arg0, %c0_i32, %arg1 : i32, i32, i32
  }
  func.func @transform_3(%arg0: i32, %arg1: i32) -> (i32, i32, i32, i32) {
    %c0_i32 = arith.constant 0 : i32
    %c0_i32_0 = arith.constant 0 : i32
    %c0_i32_1 = arith.constant 0 : i32
    return %arg0, %arg1, %c0_i32, %c0_i32_0 : i32, i32, i32, i32
  }
  func.func @transform_4(%arg0: i32, %arg1: i32) -> (i32, i32, i32, i32) {
    %c0_i32 = arith.constant 0 : i32
    %c0_i32_0 = arith.constant 0 : i32
    %c0_i32_1 = arith.constant 0 : i32
    return %arg0, %arg1, %c0_i32, %c0_i32_0 : i32, i32, i32, i32
  }
}

</mosaic_0001>

<llo_original>
// kernel: block_forward.3
$region0: #{block_forward.3}
  #allocation0 [shape = 'u32[]', space=smem, size = 0x4, offset = 0x4, fixed_abs, tag = 'smem constant byte address 0x4 - core index']
  #allocation1 [shape = 'u32[72,128]{1,0:T(1,128)}', space=vmem, size = 0x9000, scoped, tag = 'internal scratch']
  %s0 = inlined_call_operand.vmem [shape: f32[2,8,64], index: 0, kind: input, shape index: {}, may-alias: {0,3}]
  %s1 = inlined_call_operand.vmem [shape: f32[1,8,1], index: 1, kind: input, shape index: {}]
  %s2 = inlined_call_operand.vmem [shape: f32[1,8,1], index: 2, kind: input, shape index: {}]
  %s3 = inlined_call_operand.vmem [shape: f32[2,8,64], index: 3, kind: output, shape index: {}, may-alias: {0,3}]
  %s4 = sld [smem:[#allocation0]]
  $region22: #{block_forward.3} parent=0
    _
  %s6 = ssub.s32 1, %s4
  %s7 = scalar_select 0, %s6, %s4
  // Predicated region
  $region2: #{block_forward.3} parent=0 // pred_check
    _
  $region3: #{block_forward.3} parent=0 // pred_check_branch
    %9 = sbr.rel (0) target = $region5
  $region4: #{block_forward.3} parent=0 // pred_region
    _
  $region5: #{block_forward.3} parent=0 // pred_fallthru
    _
  // Predicated region
  $region6: #{block_forward.3} parent=0 // pred_check
    _
  $region7: #{block_forward.3} parent=0 // pred_check_branch
    %11 = sbr.rel (0) target = $region9
  $region8: #{block_forward.3} parent=0 // pred_region
    _
  $region9: #{block_forward.3} parent=0 // pred_fallthru
    _
  // Predicated region
  $region10: #{block_forward.3} parent=0 // pred_check
    _
  $region11: #{block_forward.3} parent=0 // pred_check_branch
    %13 = sbr.rel (0) target = $region13
  $region12: #{block_forward.3} parent=0 // pred_region
    _
  $region13: #{block_forward.3} parent=0 // pred_fallthru
    _
  %v14 = vld [vmem:[%s0] sm:$0xff]
  %v15 = vld [vmem:[%s0 + $0x8] sm:$0xff]
  %v16 = vld [vmem:[%s1] sm:$0xff]
  %18 = vset.pattern.permute.xlu0 0
  %19 = vperm.xlu0 %18, %v16
  %v20 = vpop.permute.xlu0 %19
  %v22 = vmul.f32 %v14, %v20
  %v23 = vmul.f32 %v15, %v20
  %v24 = vld [vmem:[%s2] sm:$0xff]
  %26 = vset.pattern.permute.xlu0 0
  %27 = vperm.xlu0 %26, %v24
  %v28 = vpop.permute.xlu0 %27
  %v30 = vadd.f32 %v22, %v28
  %v31 = vadd.f32 %v23, %v28
  %v32 = vmax.f32 %v30, 0.0
  %v33 = vmax.f32 %v31, 0.0
  %vm34 = vcmask 523264
  %35 = vst.msk [vmem:[%s3] sm:$0xff] %vm34, %v32
  %36 = vst.msk [vmem:[%s3 + $0x8] sm:$0xff] %vm34, %v33
  // Predicated region
  $region14: #{block_forward.3} parent=0 // pred_check
    _
  $region15: #{block_forward.3} parent=0 // pred_check_branch
    %38 = sbr.rel (0) target = $region17
  $region16: #{block_forward.3} parent=0 // pred_region
    _
  $region17: #{block_forward.3} parent=0 // pred_fallthru
    _
  // Predicated region
  $region18: #{block_forward.3} parent=0 // pred_check
    _
  $region19: #{block_forward.3} parent=0 // pred_check_branch
    %40 = sbr.rel (0) target = $region21
  $region20: #{block_forward.3} parent=0 // pred_region
    _
  $region21: #{block_forward.3} parent=0 // pred_fallthru
    _

// kernel: block_forward.2
$region0: #{block_forward.2}
  #allocation0 [shape = 'u32[]', space=smem, size = 0x4, offset = 0x4, fixed_abs, tag = 'smem constant byte address 0x4 - core index']
  #allocation1 [shape = 'u32[72,128]{1,0:T(1,128)}', space=vmem, size = 0x9000, scoped, tag = 'internal scratch']
  %s0 = inlined_call_operand.vmem [shape: f32[2,1,72,32], index: 0, kind: input, shape index: {}]
  %s1 = inlined_call_operand.vmem [shape: f32[2,8,32], index: 1, kind: input, shape index: {}]
  %s2 = inlined_call_operand.vmem [shape: f32[2,8,64], index: 2, kind: output, shape index: {0}]
  %s3 = inlined_call_operand.vmem [shape: f32[1,1,8,1], index: 3, kind: output, shape index: {1}]
  %s4 = inlined_call_operand.vmem [shape: f32[1,1,8,1], index: 4, kind: output, shape index: {2}]
  %5 = xla_tuple %s2, %s3, %s4
  %s6 = sld [smem:[#allocation0]]
  $region34: #{block_forward.2} parent=0
    _
  %s8 = ssub.s32 1, %s6
  %s9 = scalar_select 0, %s8, %s6
  // Predicated region
  $region2: #{block_forward.2} parent=0 // pred_check
    _
  $region3: #{block_forward.2} parent=0 // pred_check_branch
    %11 = sbr.rel (0) target = $region5
  $region4: #{block_forward.2} parent=0 // pred_region
    _
  $region5: #{block_forward.2} parent=0 // pred_fallthru
    _
  // Predicated region
  $region6: #{block_forward.2} parent=0 // pred_check
    _
  $region7: #{block_forward.2} parent=0 // pred_check_branch
    %13 = sbr.rel (0) target = $region9
  $region8: #{block_forward.2} parent=0 // pred_region
    _
  $region9: #{block_forward.2} parent=0 // pred_fallthru
    _
  %v14 = vld [vmem:[%s1] sm:$0xff]
  %s15 = scalar_lea.vmem %s1, 8
  %v16 = vld [vmem:[%s15] sm:$0xff]
  %v17 = vld [vmem:[%s0] sm:$0xff]
  %v18 = vld [vmem:[%s0 + $0x8] sm:$0xff]
  %v19 = vld [vmem:[%s0 + $0x10] sm:$0xff]
  %v20 = vld [vmem:[%s0 + $0x18] sm:$0xff]
  %v21 = vld [vmem:[%s0 + $0x20] sm:$0xff]
  %v22 = vld [vmem:[%s0 + $0x28] sm:$0xff]
  %v23 = vld [vmem:[%s0 + $0x30] sm:$0xff]
  %v24 = vld [vmem:[%s0 + $0x38] sm:$0xff]
  %v25 = vld [vmem:[%s0 + $0x40] sm:$0xff]
  %vm26 = vcmask 261120
  %v28 = vsel %vm26, %v16, 0
  %v31 = vsel %vm26, %v18, 0
  %v34 = vsel %vm26, %v19, 0
  %v37 = vsel %vm26, %v20, 0
  %v40 = vsel %vm26, %v21, 0
  %v43 = vsel %vm26, %v22, 0
  %v46 = vsel %vm26, %v23, 0
  %v49 = vsel %vm26, %v24, 0
  %v52 = vsel %vm26, %v25, 0
  %54 = vmatpush.xpose.msra.mxu0 0.0
  %55 = vmatpush.xpose.msra.mxu0 0.0
  %56 = vmatpush.xpose.msra.mxu0 0.0
  %57 = vmatpush.xpose.msra.mxu0 0.0
  %58 = vmatpush.xpose.msra.mxu0 0.0
  %59 = vmatpush.xpose.msra.mxu0 0.0
  %60 = vmatpush.xpose.msra.mxu0 0.0
  %61 = vmatpush.xpose.msra.mxu0 0.0
  %62 = vmatpush.xpose.msra.mxu0 %v52
  %63 = vmatpush.xpose.msra.mxu0 %v49
  %64 = vmatpush.xpose.msra.mxu0 %v46
  %65 = vmatpush.xpose.msra.mxu0 %v43
  %66 = vmatpush.xpose.msra.mxu0 %v40
  %67 = vmatpush.xpose.msra.mxu0 %v37
  %68 = vmatpush.xpose.msra.mxu0 %v34
  %69 = vmatpush.xpose.msra.mxu0 %v31
  %70 = vmatmul.f32.gmra.mxu0 %v28
  %v71 = vpop.f32.mrf.mxu0
  %v72 = vadd.f32 0.0, %v71
  %73 = vdwg.mxu0
  %v75 = vsel %vm26, %v14, 0
  %v78 = vsel %vm26, %v17, 0
  %80 = vmatpush.xpose.msra.mxu0 0.0
  %81 = vmatpush.xpose.msra.mxu0 0.0
  %82 = vmatpush.xpose.msra.mxu0 0.0
  %83 = vmatpush.xpose.msra.mxu0 0.0
  %84 = vmatpush.xpose.msra.mxu0 0.0
  %85 = vmatpush.xpose.msra.mxu0 0.0
  %86 = vmatpush.xpose.msra.mxu0 0.0
  %87 = vmatpush.xpose.msra.mxu0 0.0
  %88 = vmatpush.xpose.msra.mxu0 %v49
  %89 = vmatpush.xpose.msra.mxu0 %v46
  %90 = vmatpush.xpose.msra.mxu0 %v43
  %91 = vmatpush.xpose.msra.mxu0 %v40
  %92 = vmatpush.xpose.msra.mxu0 %v37
  %93 = vmatpush.xpose.msra.mxu0 %v34
  %94 = vmatpush.xpose.msra.mxu0 %v31
  %95 = vmatpush.xpose.msra.mxu0 %v78
  %96 = vmatmul.f32.gmra.mxu0 %v75
  %v97 = vpop.f32.mrf.mxu0
  %v98 = vadd.f32 %v72, %v97
  %99 = vdwg.mxu0
  %vm100 = vcmask 523264
  %101 = vst.msk [vmem:[%s2] sm:$0xff] %vm100, %v98
  %v102 = vsel %vm100, %v98, 0.0
  %103 = vadd.xlane.f32.xlu0 %v102
  %v104 = vpop.xlane.xlu0 %103
  %v105 = vadd.f32 %v104, 0.0
  %v106 = vmul.f32 %v98, %v98
  %v107 = vsel %vm100, %v106, 0.0
  %108 = vadd.xlane.f32.xlu0 %v107
  %v109 = vpop.xlane.xlu0 %108
  %v110 = vadd.f32 %v109, 0.0
  %s111 = scalar_lea.vmem %s0, 72
  %v112 = vld [vmem:[%s111] sm:$0xff]
  %v113 = vld [vmem:[%s111 + $0x8] sm:$0xff]
  %v114 = vld [vmem:[%s111 + $0x10] sm:$0xff]
  %v115 = vld [vmem:[%s111 + $0x18] sm:$0xff]
  %v116 = vld [vmem:[%s111 + $0x20] sm:$0xff]
  %v117 = vld [vmem:[%s111 + $0x28] sm:$0xff]
  %v118 = vld [vmem:[%s111 + $0x30] sm:$0xff]
  %v119 = vld [vmem:[%s111 + $0x38] sm:$0xff]
  %v120 = vld [vmem:[%s111 + $0x40] sm:$0xff]
  %v122 = vsel %vm26, %v113, 0
  %v125 = vsel %vm26, %v114, 0
  %v128 = vsel %vm26, %v115, 0
  %v131 = vsel %vm26, %v116, 0
  %v134 = vsel %vm26, %v117, 0
  %v137 = vsel %vm26, %v118, 0
  %v140 = vsel %vm26, %v119, 0
  %v143 = vsel %vm26, %v120, 0
  %145 = vmatpush.xpose.msra.mxu0 0.0
  %146 = vmatpush.xpose.msra.mxu0 0.0
  %147 = vmatpush.xpose.msra.mxu0 0.0
  %148 = vmatpush.xpose.msra.mxu0 0.0
  %149 = vmatpush.xpose.msra.mxu0 0.0
  %150 = vmatpush.xpose.msra.mxu0 0.0
  %151 = vmatpush.xpose.msra.mxu0 0.0
  %152 = vmatpush.xpose.msra.mxu0 0.0
  %153 = vmatpush.xpose.msra.mxu0 %v143
  %154 = vmatpush.xpose.msra.mxu0 %v140
  %155 = vmatpush.xpose.msra.mxu0 %v137
  %156 = vmatpush.xpose.msra.mxu0 %v134
  %157 = vmatpush.xpose.msra.mxu0 %v131
  %158 = vmatpush.xpose.msra.mxu0 %v128
  %159 = vmatpush.xpose.msra.mxu0 %v125
  %160 = vmatpush.xpose.msra.mxu0 %v122
  %161 = vmatmul.f32.gmra.mxu0 %v28
  %v162 = vpop.f32.mrf.mxu0
  %v163 = vadd.f32 0.0, %v162
  %164 = vdwg.mxu0
  %v166 = vsel %vm26, %v112, 0
  %168 = vmatpush.xpose.msra.mxu0 0.0
  %169 = vmatpush.xpose.msra.mxu0 0.0
  %170 = vmatpush.xpose.msra.mxu0 0.0
  %171 = vmatpush.xpose.msra.mxu0 0.0
  %172 = vmatpush.xpose.msra.mxu0 0.0
  %173 = vmatpush.xpose.msra.mxu0 0.0
  %174 = vmatpush.xpose.msra.mxu0 0.0
  %175 = vmatpush.xpose.msra.mxu0 0.0
  %176 = vmatpush.xpose.msra.mxu0 %v140
  %177 = vmatpush.xpose.msra.mxu0 %v137
  %178 = vmatpush.xpose.msra.mxu0 %v134
  %179 = vmatpush.xpose.msra.mxu0 %v131
  %180 = vmatpush.xpose.msra.mxu0 %v128
  %181 = vmatpush.xpose.msra.mxu0 %v125
  %182 = vmatpush.xpose.msra.mxu0 %v122
  %183 = vmatpush.xpose.msra.mxu0 %v166
  %184 = vmatmul.f32.gmra.mxu0 %v75
  %v185 = vpop.f32.mrf.mxu0
  %v186 = vadd.f32 %v163, %v185
  %187 = vdwg.mxu0
  %s188 = scalar_lea.vmem %s2, 8
  %189 = vst.msk [vmem:[%s188] sm:$0xff] %vm100, %v186
  %v190 = vsel %vm100, %v186, 0.0
  %191 = vadd.xlane.f32.xlu0 %v190
  %v192 = vpop.xlane.xlu0 %191
  %v193 = vadd.f32 %v105, %v192
  %v194 = vmul.f32 %v186, %v186
  %v195 = vsel %vm100, %v194, 0.0
  %196 = vadd.xlane.f32.xlu0 %v195
  %v197 = vpop.xlane.xlu0 %196
  %v198 = vadd.f32 %v110, %v197
  %vm199 = vcmask 7168
  %200 = vst.msk [vmem:[%s3] sm:$0xff] %vm199, %v193
  %201 = vst.msk [vmem:[%s4] sm:$0xff] %vm199, %v198
  // Predicated region
  $region10: #{block_forward.2} parent=0 // pred_check
    _
  $region11: #{block_forward.2} parent=0 // pred_check_branch
    %203 = sbr.rel (0) target = $region13
  $region12: #{block_forward.2} parent=0 // pred_region
    _
  $region13: #{block_forward.2} parent=0 // pred_fallthru
    _
  // Predicated region
  $region14: #{block_forward.2} parent=0 // pred_check
    _
  $region15: #{block_forward.2} parent=0 // pred_check_branch
    %205 = sbr.rel (0) target = $region17
  $region16: #{block_forward.2} parent=0 // pred_region
    _
  $region17: #{block_forward.2} parent=0 // pred_fallthru
    _
  // Predicated region
  $region18: #{block_forward.2} parent=0 // pred_check
    _
  $region19: #{block_forward.2} parent=0 // pred_check_branch
    %207 = sbr.rel (0) target = $region21
  $region20: #{block_forward.2} parent=0 // pred_region
    _
  $region21: #{block_forward.2} parent=0 // pred_fallthru
    _
  // Predicated region
  $region22: #{block_forward.2} parent=0 // pred_check
    _
  $region23: #{block_forward.2} parent=0 // pred_check_branch
    %209 = sbr.rel (0) target = $region25
  $region24: #{block_forward.2} parent=0 // pred_region
    _
  $region25: #{block_forward.2} parent=0 // pred_fallthru
    _
  // Predicated region
  $region26: #{block_forward.2} parent=0 // pred_check
    _
  $region27: #{block_forward.2} parent=0 // pred_check_branch
    %211 = sbr.rel (0) target = $region29
  $region28: #{block_forward.2} parent=0 // pred_region
    _
  $region29: #{block_forward.2} parent=0 // pred_fallthru
    _
  // Predicated region
  $region30: #{block_forward.2} parent=0 // pred_check
    _
  $region31: #{block_forward.2} parent=0 // pred_check_branch
    %213 = sbr.rel (0) target = $region33
  $region32: #{block_forward.2} parent=0 // pred_region
    _
  $region33: #{block_forward.2} parent=0 // pred_fallthru
    _

</llo_original>
